<compile_context>
chip_gen: v5e
topology: v5e:2x2
jax: 0.10.0
libtpu: 0.0.40
codegen_flags: <defaults>
</compile_context>

<pallas_src>
import jax
import jax.numpy as jnp
from jax import lax
from jax.experimental import pallas as pl
from jax.experimental.pallas import tpu as pltpu


def _make_kernel(tkv):
    def kernel(x_ref, w_ref, o_ref, qkv_scr):
        # x_ref   : (1, Cin, N)      f32, channel-major batch slice (resident across qi)
        # w_ref   : (3*Cout, Cin)    bf16, fused [Wq/temp; Wk; Wv]
        # o_ref   : (1, Cout, tq)    output tile, channel-major (lane-dense point axis)
        # qkv_scr : (3, Cout, N)     bf16 scratch: plane 0=q (pre-scaled), 1=k, 2=v
        qi = pl.program_id(1)
        cout = o_ref.shape[1]
        tq = o_ref.shape[2]
        n = qkv_scr.shape[2]
        n_kv = n // tkv

        # --- per-batch prologue: fused QKV projection, chunked over N ----------
        @pl.when(qi == 0)
        def _():
            def proj(j, carry):
                s = pl.multiple_of(j * tkv, tkv)
                xc = x_ref[0, :, pl.ds(s, tkv)].astype(jnp.bfloat16)      # (Cin, tkv)
                qkv = lax.dot_general(
                    w_ref[...], xc,
                    dimension_numbers=(((1,), (0,)), ((), ())),           # (3Cout,Cin)@(Cin,tkv)
                    preferred_element_type=jnp.float32)                   # (3Cout, tkv) f32
                # Cout % 8 == 0 -> these value-level row slices are f32 tile-aligned.
                qkv_scr[0, :, pl.ds(s, tkv)] = qkv[0:cout].astype(qkv_scr.dtype)
                qkv_scr[1, :, pl.ds(s, tkv)] = qkv[cout:2 * cout].astype(qkv_scr.dtype)
                qkv_scr[2, :, pl.ds(s, tkv)] = qkv[2 * cout:3 * cout].astype(qkv_scr.dtype)
                return carry

            lax.fori_loop(0, n_kv, proj, 0, unroll=True)

        # --- this q tile (already scaled by 1/sqrt(Cout) via Wq) ---------------
        q_start = pl.multiple_of(qi * tq, tq)
        q = qkv_scr[0, :, pl.ds(q_start, tq)]                             # (Cout, tq) bf16

        m0 = jnp.full((1, tq), -jnp.inf, jnp.float32)
        l0 = jnp.zeros((1, tq), jnp.float32)
        acc0 = jnp.zeros((cout, tq), jnp.float32)

        def body(j, carry):
            m, l, acc = carry
            s0 = pl.multiple_of(j * tkv, tkv)
            k_c = qkv_scr[1, :, pl.ds(s0, tkv)]                           # (Cout, tkv) bf16
            v_c = qkv_scr[2, :, pl.ds(s0, tkv)]                           # (Cout, tkv) bf16

            # s[m, n] = sum_c k[c, m] * q[c, n]  -> (tkv, tq); softmax over axis 0.
            s = lax.dot_general(
                k_c, q, dimension_numbers=(((0,), (0,)), ((), ())),
                preferred_element_type=jnp.float32)                       # (tkv, tq) f32

            m_new = jnp.maximum(m, jnp.max(s, axis=0, keepdims=True))     # (1, tq)
            alpha = jnp.exp(m - m_new)                                    # (1, tq)
            p = jnp.exp(s - m_new)                                        # (tkv, tq)
            l = alpha * l + jnp.sum(p, axis=0, keepdims=True)
            # y[c, n] += sum_m v[c, m] * p[m, n]   (plain NN matmul)
            acc = alpha * acc + lax.dot_general(
                v_c, p.astype(v_c.dtype),
                dimension_numbers=(((1,), (0,)), ((), ())),
                preferred_element_type=jnp.float32)                       # (Cout, tq)
            return m_new, l, acc

        _, l, acc = lax.fori_loop(0, n_kv, body, (m0, l0, acc0),
                                  unroll=True if n_kv <= 8 else 2)

        # attention dropout: eval-mode identity.
        o_ref[0] = (acc * pl.reciprocal(l, approx=True)).astype(o_ref.dtype)

    return kernel


def self_attention(x, wq, wk, wv, *, tq=None, tkv=None):
    """x: (B, Cin, N) float32; wq/wk/wv: (Cout, Cin) Conv1d(k=1) weights (squeezed).
    Returns (B, Cout, N), matching the PyTorch module's output convention."""
    B, Cin, N = x.shape
    Cout = wq.shape[0]
    assert Cin % 8 == 0 and Cout % 8 == 0, "channel dims should be 8-aligned"

    # q-tile: one step per batch for small N, 256 for the 256-wide MXUs of v6e/v7x.
    if tq is None:
        tq = N if N <= 2048 else 256
    tq = min(tq, N)
    assert N % tq == 0, "num_points must be a multiple of the q-tile size"

    # kv chunk for the online softmax (must divide N).
    if tkv is None:
        tkv = next((c for c in (1024, 512, 256, 128) if N % c == 0), N)
    tkv = min(tkv, N)
    assert N % tkv == 0, "num_points must be a multiple of the kv chunk size"

    # Fold the 1/temperature scale into Wq; fuse the three projection weights.
    # bf16 operands for the MXU (production weights would already be fused/bf16).
    scale = 1.0 / (Cout ** 0.5)
    w_qkv = jnp.concatenate([wq * scale, wk, wv], axis=0).astype(jnp.bfloat16)

    # Rough VMEM budget -> explicit scoped limit (v5e default is only 16 MiB).
    est = (3 * Cout * N * 2            # qkv scratch (persistent, bf16)
           + 2 * Cin * N * 4           # x slab double buffer (f32)
           + 2 * Cout * tq * 4         # out tile double buffer
           + 2 * 3 * Cout * Cin * 2    # weight double buffer
           + 4 * tkv * tq * 4          # score / exp temporaries
           + 4 * Cout * tq * 4)        # accumulator + misc
    vmem_limit = int(max(32 << 20, min(2 * est, 96 << 20)))

    return pl.pallas_call(
        _make_kernel(tkv),
        out_shape=jax.ShapeDtypeStruct((B, Cout, N), x.dtype),
        grid_spec=pltpu.PrefetchScalarGridSpec(
            num_scalar_prefetch=0,
            grid=(B, N // tq),
            in_specs=[
                # x slab for the current batch; index ignores qi, so it is
                # DMA'd once per batch and revisited across all q tiles.
                pl.BlockSpec((1, Cin, N), lambda b, qi: (b, 0, 0)),
                pl.BlockSpec((3 * Cout, Cin), lambda b, qi: (0, 0)),
            ],
            out_specs=pl.BlockSpec((1, Cout, tq), lambda b, qi: (b, 0, qi)),
            scratch_shapes=[pltpu.VMEM((3, Cout, N), jnp.bfloat16)],
        ),
        compiler_params=pltpu.CompilerParams(
            dimension_semantics=("parallel", "arbitrary"),
            vmem_limit_bytes=vmem_limit),
    )(x, w_qkv)


def _reference(x, wq, wk, wv):
    """Pure-JAX f32 reference mirroring the PyTorch forward (eval mode)."""
    Cout = wq.shape[0]
    temp = Cout ** 0.5
    q = jnp.einsum("oi,bin->bon", wq, x)
    k = jnp.einsum("oi,bin->bon", wk, x)
    v = jnp.einsum("oi,bin->bon", wv, x)
    attn = jnp.einsum("bon,bom->bnm", q / temp, k)
    attn = jax.nn.softmax(attn, axis=-1)
    y = jnp.einsum("bnm,bom->bno", attn, v)
    return jnp.transpose(y, (0, 2, 1))


if __name__ == "__main__":
    B, Cin, Cout, N = 2, 32, 32, 256

    key = jax.random.PRNGKey(0)
    kx, kq, kk, kv = jax.random.split(key, 4)

    x = jax.random.normal(kx, (B, Cin, N), dtype=jnp.float32)

    # Conv1d(Cin, Cout, 1, bias=False) weight (Cout, Cin, 1) squeezed;
    # PyTorch-like uniform(-1/sqrt(Cin), 1/sqrt(Cin)) init.
    bound = 1.0 / (Cin ** 0.5)
    wq = jax.random.uniform(kq, (Cout, Cin), jnp.float32, -bound, bound)
    wk = jax.random.uniform(kk, (Cout, Cin), jnp.float32, -bound, bound)
    wv = jax.random.uniform(kv, (Cout, Cin), jnp.float32, -bound, bound)

    y = self_attention(x, wq, wk, wv)
    y = jax.block_until_ready(y)

    y_ref = _reference(x, wq, wk, wv)
    assert y.shape == (B, Cout, N)
    # bf16 MXU operands + approx EUP reciprocal -> looser tolerance than pure f32.
    assert jnp.allclose(y, y_ref, atol=2e-2, rtol=2e-2), float(
        jnp.max(jnp.abs(y - y_ref)))

    print("KERNEL_OK")
</pallas_src>

<mosaic_0001>
module attributes {stable_mosaic.version = 11 : i64} {
  func.func @kernel(%arg0: i32, %arg1: i32, %arg2: memref<1x32x256xf32, #tpu.memory_space<vmem>>, %arg3: memref<96x32xbf16, #tpu.memory_space<vmem>>, %arg4: memref<1x32x256xf32, #tpu.memory_space<vmem>>, %arg5: memref<3x32x256xbf16, #tpu.memory_space<vmem>>) attributes {dimension_semantics = [#tpu.dimension_semantics<parallel>, #tpu.dimension_semantics<arbitrary>], iteration_bounds = array<i64: 2, 1>, scalar_prefetch = 0 : i64, scratch_operands = 1 : i64, tpu.core_type = #tpu.core_type<tc>, window_params = [{transform_indices = @transform_0, window_bounds = array<i64: 1, 32, 256>}, {pipeline_mode = #tpu.pipeline_mode<synchronous>, transform_indices = @transform_1, window_bounds = array<i64: 96, 32>}, {transform_indices = @transform_2, window_bounds = array<i64: 1, 32, 256>}]} {
    %c0_i32 = arith.constant 0 : i32
    %0 = arith.cmpi eq, %arg1, %c0_i32 : i32
    %1 = arith.extui %0 : i1 to i32
    %c0_i32_0 = arith.constant 0 : i32
    %2 = arith.cmpi ne, %1, %c0_i32_0 : i32
    scf.if %2 {
      %c0_i32_15 = arith.constant 0 : i32
      %c256_i32_16 = arith.constant 256 : i32
      %43 = arith.muli %c0_i32_15, %c256_i32_16 : i32
      %44 = tpu.assume_multiple %43, 256 : i32
      %c0_17 = arith.constant 0 : index
      %c0_18 = arith.constant 0 : index
      %45 = arith.index_cast %44 : i32 to index
      %46 = vector.load %arg2[%c0_17, %c0_18, %45] : memref<1x32x256xf32, #tpu.memory_space<vmem>>, vector<1x32x256xf32>
      %47 = vector.shape_cast %46 : vector<1x32x256xf32> to vector<32x256xf32>
      %48 = arith.truncf %47 : vector<32x256xf32> to vector<32x256xbf16>
      %c0_19 = arith.constant 0 : index
      %c0_20 = arith.constant 0 : index
      %49 = vector.load %arg3[%c0_19, %c0_20] : memref<96x32xbf16, #tpu.memory_space<vmem>>, vector<96x32xbf16>
      %cst_21 = arith.constant dense<0.000000e+00> : vector<96x256xf32>
      %50 = tpu.matmul %49, %48, %cst_21 {dimension_numbers = #tpu.dot_dimension_numbers<[1], [0], [0], [1], [0, 0, 1, 1], [], []>} : vector<96x32xbf16>, vector<32x256xbf16>, vector<96x256xf32> -> vector<96x256xf32>
      %51 = vector.extract_strided_slice %50 {offsets = [0, 0], sizes = [32, 256], strides = [1, 1]} : vector<96x256xf32> to vector<32x256xf32>
      %52 = arith.truncf %51 : vector<32x256xf32> to vector<32x256xbf16>
      %c0_22 = arith.constant 0 : index
      %c0_23 = arith.constant 0 : index
      %53 = arith.index_cast %44 : i32 to index
      %54 = vector.load %arg5[%c0_22, %c0_23, %53] : memref<3x32x256xbf16, #tpu.memory_space<vmem>>, vector<1x32x256xbf16>
      %55 = vector.shape_cast %54 : vector<1x32x256xbf16> to vector<32x256xbf16>
      %56 = vector.shape_cast %52 : vector<32x256xbf16> to vector<1x32x256xbf16>
      tpu.vector_store %arg5[%c0_22, %c0_23, %53], %56 {strides = array<i32>} : memref<3x32x256xbf16, #tpu.memory_space<vmem>>, vector<1x32x256xbf16>,
      %57 = vector.extract_strided_slice %50 {offsets = [32, 0], sizes = [32, 256], strides = [1, 1]} : vector<96x256xf32> to vector<32x256xf32>
      %58 = arith.truncf %57 : vector<32x256xf32> to vector<32x256xbf16>
      %c1_24 = arith.constant 1 : index
      %c0_25 = arith.constant 0 : index
      %59 = arith.index_cast %44 : i32 to index
      %60 = vector.load %arg5[%c1_24, %c0_25, %59] : memref<3x32x256xbf16, #tpu.memory_space<vmem>>, vector<1x32x256xbf16>
      %61 = vector.shape_cast %60 : vector<1x32x256xbf16> to vector<32x256xbf16>
      %62 = vector.shape_cast %58 : vector<32x256xbf16> to vector<1x32x256xbf16>
      tpu.vector_store %arg5[%c1_24, %c0_25, %59], %62 {strides = array<i32>} : memref<3x32x256xbf16, #tpu.memory_space<vmem>>, vector<1x32x256xbf16>,
      %63 = vector.extract_strided_slice %50 {offsets = [64, 0], sizes = [32, 256], strides = [1, 1]} : vector<96x256xf32> to vector<32x256xf32>
      %64 = arith.truncf %63 : vector<32x256xf32> to vector<32x256xbf16>
      %c2_26 = arith.constant 2 : index
      %c0_27 = arith.constant 0 : index
      %65 = arith.index_cast %44 : i32 to index
      %66 = vector.load %arg5[%c2_26, %c0_27, %65] : memref<3x32x256xbf16, #tpu.memory_space<vmem>>, vector<1x32x256xbf16>
      %67 = vector.shape_cast %66 : vector<1x32x256xbf16> to vector<32x256xbf16>
      %68 = vector.shape_cast %64 : vector<32x256xbf16> to vector<1x32x256xbf16>
      tpu.vector_store %arg5[%c2_26, %c0_27, %65], %68 {strides = array<i32>} : memref<3x32x256xbf16, #tpu.memory_space<vmem>>, vector<1x32x256xbf16>,
      %c1_i32_28 = arith.constant 1 : i32
    } else {
    }
    %c256_i32 = arith.constant 256 : i32
    %3 = arith.muli %arg1, %c256_i32 : i32
    %4 = tpu.assume_multiple %3, 256 : i32
    %c0 = arith.constant 0 : index
    %c0_1 = arith.constant 0 : index
    %5 = arith.index_cast %4 : i32 to index
    %6 = vector.load %arg5[%c0, %c0_1, %5] : memref<3x32x256xbf16, #tpu.memory_space<vmem>>, vector<1x32x256xbf16>
    %7 = vector.shape_cast %6 : vector<1x32x256xbf16> to vector<32x256xbf16>
    %cst = arith.constant 0xFF800000 : f32
    %8 = vector.broadcast %cst : f32 to vector<1x256xf32>
    %cst_2 = arith.constant 0.000000e+00 : f32
    %9 = vector.broadcast %cst_2 : f32 to vector<1x256xf32>
    %cst_3 = arith.constant 0.000000e+00 : f32
    %10 = vector.broadcast %cst_3 : f32 to vector<32x256xf32>
    %c0_i32_4 = arith.constant 0 : i32
    %c256_i32_5 = arith.constant 256 : i32
    %11 = arith.muli %c0_i32_4, %c256_i32_5 : i32
    %12 = tpu.assume_multiple %11, 256 : i32
    %c1 = arith.constant 1 : index
    %c0_6 = arith.constant 0 : index
    %13 = arith.index_cast %12 : i32 to index
    %14 = vector.load %arg5[%c1, %c0_6, %13] : memref<3x32x256xbf16, #tpu.memory_space<vmem>>, vector<1x32x256xbf16>
    %15 = vector.shape_cast %14 : vector<1x32x256xbf16> to vector<32x256xbf16>
    %c2 = arith.constant 2 : index
    %c0_7 = arith.constant 0 : index
    %16 = arith.index_cast %12 : i32 to index
    %17 = vector.load %arg5[%c2, %c0_7, %16] : memref<3x32x256xbf16, #tpu.memory_space<vmem>>, vector<1x32x256xbf16>
    %18 = vector.shape_cast %17 : vector<1x32x256xbf16> to vector<32x256xbf16>
    %cst_8 = arith.constant dense<0.000000e+00> : vector<256x256xf32>
    %19 = tpu.matmul %15, %7, %cst_8 {dimension_numbers = #tpu.dot_dimension_numbers<[0], [0], [1], [1], [0, 1, 1, 1], [], []>} : vector<32x256xbf16>, vector<32x256xbf16>, vector<256x256xf32> -> vector<256x256xf32>
    %cst_9 = arith.constant dense<0xFF800000> : vector<256xf32>
    %20 = vector.multi_reduction <maximumf>, %19, %cst_9 [0] : vector<256x256xf32> to vector<256xf32>
    %21 = vector.shape_cast %20 : vector<256xf32> to vector<1x256xf32>
    %22 = arith.maximumf %8, %21 : vector<1x256xf32>
    %23 = arith.subf %8, %22 : vector<1x256xf32>
    %24 = math.exp %23 : vector<1x256xf32>
    %25 = vector.broadcast %22 : vector<1x256xf32> to vector<256x256xf32>
    %26 = arith.subf %19, %25 : vector<256x256xf32>
    %27 = math.exp %26 : vector<256x256xf32>
    %28 = arith.mulf %24, %9 : vector<1x256xf32>
    %cst_10 = arith.constant dense<0.000000e+00> : vector<256xf32>
    %29 = vector.multi_reduction <add>, %27, %cst_10 [0] : vector<256x256xf32> to vector<256xf32>
    %30 = vector.shape_cast %29 : vector<256xf32> to vector<1x256xf32>
    %31 = arith.addf %28, %30 : vector<1x256xf32>
    %32 = vector.broadcast %24 : vector<1x256xf32> to vector<32x256xf32>
    %33 = arith.mulf %32, %10 : vector<32x256xf32>
    %34 = arith.truncf %27 : vector<256x256xf32> to vector<256x256xbf16>
    %cst_11 = arith.constant dense<0.000000e+00> : vector<32x256xf32>
    %35 = tpu.matmul %18, %34, %cst_11 {dimension_numbers = #tpu.dot_dimension_numbers<[1], [0], [0], [1], [0, 0, 1, 1], [], []>} : vector<32x256xbf16>, vector<256x256xbf16>, vector<32x256xf32> -> vector<32x256xf32>
    %36 = arith.addf %33, %35 : vector<32x256xf32>
    %c1_i32 = arith.constant 1 : i32
    %37 = tpu.reciprocal %31 {approx = true} : vector<1x256xf32> -> vector<1x256xf32>
    %38 = vector.broadcast %37 : vector<1x256xf32> to vector<32x256xf32>
    %39 = arith.mulf %36, %38 : vector<32x256xf32>
    %c0_12 = arith.constant 0 : index
    %c0_13 = arith.constant 0 : index
    %c0_14 = arith.constant 0 : index
    %40 = vector.load %arg4[%c0_12, %c0_13, %c0_14] : memref<1x32x256xf32, #tpu.memory_space<vmem>>, vector<1x32x256xf32>
    %41 = vector.shape_cast %40 : vector<1x32x256xf32> to vector<32x256xf32>
    %42 = vector.shape_cast %39 : vector<32x256xf32> to vector<1x32x256xf32>
    tpu.vector_store %arg4[%c0_12, %c0_13, %c0_14], %42 {strides = array<i32>} : memref<1x32x256xf32, #tpu.memory_space<vmem>>, vector<1x32x256xf32>,
    return
  }
  func.func @transform_0(%arg0: i32, %arg1: i32) -> (i32, i32, i32) {
    %c0_i32 = arith.constant 0 : i32
    %c0_i32_0 = arith.constant 0 : i32
    %c0_i32_1 = arith.constant 0 : i32
    return %arg0, %c0_i32, %c0_i32_0 : i32, i32, i32
  }
  func.func @transform_1(%arg0: i32, %arg1: i32) -> (i32, i32) {
    %c0_i32 = arith.constant 0 : i32
    %c0_i32_0 = arith.constant 0 : i32
    %c0_i32_1 = arith.constant 0 : i32
    return %c0_i32, %c0_i32_0 : i32, i32
  }
  func.func @transform_2(%arg0: i32, %arg1: i32) -> (i32, i32, i32) {
    %c0_i32 = arith.constant 0 : i32
    %c0_i32_0 = arith.constant 0 : i32
    return %arg0, %c0_i32, %arg1 : i32, i32, i32
  }
}

</mosaic_0001>

<llo_original>
// kernel: tpu_custom_call.1
$region0: #{tpu_custom_call.1}
  #allocation0 [shape = 'u32[]', space=smem, size = 0x4, offset = 0x4, fixed_abs, tag = 'smem constant byte address 0x4 - core index']
  #allocation1 [shape = 'u32[72,128]{1,0:T(1,128)}', space=vmem, size = 0x9000, scoped, tag = 'internal scratch']
  #allocation2 [shape = 'bf16[3,32,256]{2,1,0:T(8,128)(2,1)}', space=vmem, size = 0xc000, scoped, tag = 'scratch operand']
  %s0 = inlined_call_operand.hbm [shape: f32[2,32,256], index: 0, kind: input, shape index: {}]
  %s1 = inlined_call_operand.vmem [shape: bf16[96,32], index: 1, kind: input, shape index: {}]
  %s2 = inlined_call_operand.hbm [shape: f32[2,32,256], index: 2, kind: output, shape index: {}]
  %s3 = sld [smem:[#allocation0]]
  $region49: #{tpu_custom_call.1} parent=0
    _
  %s5 = ssub.s32 1, %s3
  %s6 = scalar_select 0, %s5, %s3
  $region1: #{tpu_custom_call.1} parent=0
    #allocation3 [shape = 'u8[65536]{0}', space=vmem, size = 0x10000, scoped, tag = 'input window, operand 0']
    #allocation4 [shape = 's32[2]{0}', space=sflag, size = 0x8, scoped, tag = 'scoped memory for tpu_custom_call.1']
    #allocation5 [shape = 's32[2]{0}', space=sflag, size = 0x8, scoped, tag = 'scoped memory for tpu_custom_call.1']
    #allocation6 [shape = 'u8[65536]{0}', space=vmem, size = 0x10000, scoped, tag = 'output window, operand 0']
    %7 = vsyncpa [#allocation4], 0
    %s8 = scalar_lea.sflag [#allocation4], 1
    %9 = vsyncpa %s8, 0
    %10 = vsyncpa [#allocation5], 0
    %s11 = scalar_lea.sflag [#allocation5], 1
    %12 = vsyncpa %s11, 0
    loop: start=0, step=1, limit=4
    $region2: #{tpu_custom_call.1} parent=1 // loop_pre_header
      _
    $region3: #{tpu_custom_call.1} parent=1 // loop_header
      %s14 = sphi 0, %s18
      %p15 = scmp.ge.s32.totalorder %s14, 4
      %s21 = sphi 0, %s33
      %s22 = sphi 0, %s29
      %s23 = sphi 0, %s21
      %s24 = sphi 0, %s22
      %s25 = sphi 0, %s23
      %s26 = sphi 0, %s24
      %s36 = sphi 0, %s38
      %s39 = sphi 0, %s36
      %s40 = sphi 0, %s39
      %s56 = sphi 0, %s40
      %s60 = sphi 0, %s60
      %s62 = sphi 0, %s60
      %s63 = sphi 0, %s62
      %s77 = sphi 0, %s63
      %s85 = sphi 0, %s87
      %s88 = sphi 0, %s85
      %s89 = sphi 0, %s88
      %s105 = sphi 0, %s89
    $region4: #{tpu_custom_call.1} parent=1 // loop_header_branch
      %17 = sbr.rel (%p15) target = $region8
    $region5: #{tpu_custom_call.1} parent=1 // loop_body
      %s19 = ssub.s32 %s14, 1
      %s20 = ssub.s32 %s14, 2
      %s27 = sadd.s32 1, %s22
      %p28 = scmp.ge.s32.totalorder %s27, 1
      %s29 = scalar_select %p28, 0, %s27
      %s30 = sadd.s32 1, %s21
      %s31 = scalar_select %p28, %s30, %s21
      %p32 = scmp.ge.s32.totalorder %s31, 2
      %s33 = scalar_select %p32, 0, %s31
      %s34 = ssub.s32 %s21, %s33
      %p35 = scmp.eq.s32.totalorder %s34, 0
      %s37 = sadd.s32 %s36, 1
      %s38 = scalar_select %p35, %s36, %s37
      %p41 = pneg %p35
      %p42 = scmp.eq.s32.totalorder %s14, 1
      %p43 = por %p41, %p42
      %p44 = scmp.ne.s32.totalorder %s36, %s39
      %p45 = scmp.eq.s32.totalorder %s14, 0
      %p46 = por %p44, %p45
      %p47 = scmp.ne.s32.totalorder %s36, %s39
      %p48 = scmp.eq.s32.totalorder %s19, 1
      %p49 = por %p47, %p48
      %p50 = scmp.ne.s32.totalorder %s39, %s40
      %p51 = scmp.eq.s32.totalorder %s19, 0
      %p52 = por %p50, %p51
      %p53 = scmp.ne.s32.totalorder %s39, %s40
      %p54 = scmp.eq.s32.totalorder %s20, 1
      %p55 = por %p53, %p54
      %p57 = scmp.ne.s32.totalorder %s40, %s56
      %p58 = scmp.eq.s32.totalorder %s20, 0
      %p59 = por %p57, %p58
      %s61 = sadd.s32 %s60, 1
      %p64 = scmp.eq.s32.totalorder %s14, 1
      %p65 = scmp.ne.s32.totalorder %s60, %s62
      %p66 = scmp.eq.s32.totalorder %s14, 0
      %p67 = por %p65, %p66
      %p68 = scmp.ne.s32.totalorder %s60, %s62
      %p69 = scmp.eq.s32.totalorder %s19, 1
      %p70 = por %p68, %p69
      %p71 = scmp.ne.s32.totalorder %s62, %s63
      %p72 = scmp.eq.s32.totalorder %s19, 0
      %p73 = por %p71, %p72
      %p74 = scmp.ne.s32.totalorder %s62, %s63
      %p75 = scmp.eq.s32.totalorder %s20, 1
      %p76 = por %p74, %p75
      %p78 = scmp.ne.s32.totalorder %s63, %s77
      %p79 = scmp.eq.s32.totalorder %s20, 0
      %p80 = por %p78, %p79
      %s81 = ssub.s32 %s21, %s33
      %s82 = ssub.s32 %s22, %s29
      %s83 = sor.u32 %s81, %s82
      %p84 = scmp.eq.s32.totalorder %s83, 0
      %s86 = sadd.s32 %s85, 1
      %s87 = scalar_select %p84, %s85, %s86
      %p90 = pneg %p84
      %p91 = scmp.eq.s32.totalorder %s14, 1
      %p92 = por %p90, %p91
      %p93 = scmp.ne.s32.totalorder %s85, %s88
      %p94 = scmp.eq.s32.totalorder %s14, 0
      %p95 = por %p93, %p94
      %p96 = scmp.ne.s32.totalorder %s85, %s88
      %p97 = scmp.eq.s32.totalorder %s19, 1
      %p98 = por %p96, %p97
      %p99 = scmp.ne.s32.totalorder %s88, %s89
      %p100 = scmp.eq.s32.totalorder %s19, 0
      %p101 = por %p99, %p100
      %p102 = scmp.ne.s32.totalorder %s88, %s89
      %p103 = scmp.eq.s32.totalorder %s20, 1
      %p104 = por %p102, %p103
      %p106 = scmp.ne.s32.totalorder %s89, %s105
      %p107 = scmp.eq.s32.totalorder %s20, 0
      %p108 = por %p106, %p107
      %p109 = scmp.le.s32.totalorder 1, %s14
      %p110 = scmp.lt.s32.totalorder %s14, 3
      %p111 = pnand %p109, %p110
      %p112 = pneg %p111
      // Predicated region
      $region9: #{tpu_custom_call.1} parent=5 // pred_check
        _
      $region10: #{tpu_custom_call.1} parent=5 // pred_check_branch
        %114 = sbr.rel (%p111) target = $region12
      $region11: #{tpu_custom_call.1} parent=5 // pred_region
        %s115 = ssub.s32 %s14, 1
        // Predicated region
        $region13: #{tpu_custom_call.1} parent=11 // pred_check
          %p116 = pneg %p73
        $region14: #{tpu_custom_call.1} parent=11 // pred_check_branch
          %118 = sbr.rel (%p116) target = $region16
        $region15: #{tpu_custom_call.1} parent=11 // pred_region
          _
        $region16: #{tpu_custom_call.1} parent=11 // pred_fallthru
          _
      $region12: #{tpu_custom_call.1} parent=5 // pred_fallthru
        _
      %p119 = scmp.lt.s32.totalorder %s14, 2
      // Predicated region
      $region17: #{tpu_custom_call.1} parent=5 // pred_check
        %p120 = pneg %p119
      $region18: #{tpu_custom_call.1} parent=5 // pred_check_branch
        %122 = sbr.rel (%p120) target = $region20
      $region19: #{tpu_custom_call.1} parent=5 // pred_region
        // Predicated region
        $region21: #{tpu_custom_call.1} parent=19 // pred_check
          %p123 = pneg %p46
        $region22: #{tpu_custom_call.1} parent=19 // pred_check_branch
          %125 = sbr.rel (%p123) target = $region24
        $region23: #{tpu_custom_call.1} parent=19 // pred_region
          %s126 = sand.u32 %s36, 1
          %s127 = scalar_lea.sflag [#allocation4], %s126
          %s128 = sand.u32 %s36, 1
          %s129 = smul.addr %s128, 64
          %s130 = scalar_lea.vmem [#allocation3], %s129
          %132 = vsyncadd %s127, 0
          %s133 = smul.addr %s21, 8
          %s134 = smul.addr %s133, 8
          %s135 = scalar_lea.hbm %s0, %s134
          %s136 = sshll.u32 %s135, 4
          %s137 = int_to_ptr.hbm [resolvable:$true] %s136
          %s138 = sshll.u32 %s130, 4
          %s139 = int_to_ptr.vmem [resolvable:$true] %s138
          %144 = dma.hbm_to_vmem [thread:$0]  %s137, 1024, %s139, %s127, 256, 256, 16
        $region24: #{tpu_custom_call.1} parent=19 // pred_fallthru
          _
      $region20: #{tpu_custom_call.1} parent=5 // pred_fallthru
        _
      %p145 = scmp.le.s32.totalorder 1, %s14
      %p146 = scmp.lt.s32.totalorder %s14, 3
      %p147 = pnand %p145, %p146
      %p148 = pneg %p147
      // Predicated region
      $region25: #{tpu_custom_call.1} parent=5 // pred_check
        _
      $region26: #{tpu_custom_call.1} parent=5 // pred_check_branch
        %150 = sbr.rel (%p147) target = $region28
      $region27: #{tpu_custom_call.1} parent=5 // pred_region
        %s151 = ssub.s32 %s14, 1
        %s152 = sand.u32 %s39, 1
        %s153 = scalar_lea.sflag [#allocation4], %s152
        %s154 = sand.u32 %s39, 1
        %s155 = smul.addr %s154, 64
        %s156 = scalar_lea.vmem [#allocation3], %s155
        // Predicated region
        $region29: #{tpu_custom_call.1} parent=27 // pred_check
          %p157 = pneg %p52
        $region30: #{tpu_custom_call.1} parent=27 // pred_check_branch
          %159 = sbr.rel (%p157) target = $region32
        $region31: #{tpu_custom_call.1} parent=27 // pred_region
          %161 = dma.done %s153, 1024
        $region32: #{tpu_custom_call.1} parent=27 // pred_fallthru
          _
        %s162 = sand.u32 %s39, 1
        %s163 = scalar_lea.sflag [#allocation4], %s162
        %s164 = sand.u32 %s39, 1
        %s165 = smul.addr %s164, 64
        %s166 = scalar_lea.vmem [#allocation3], %s165
        %p167 = pneg %p52
        %p168 = pneg %p49
        %p169 = pneg %p73
        %p170 = pneg %p70
        %p171 = pneg %p101
        %p172 = pneg %p98
        %s173 = sand.u32 %s88, 1
        %s174 = scalar_lea.sflag [#allocation5], %s173
        %s175 = sand.u32 %s88, 1
        %s176 = smul.addr %s175, 64
        %s177 = scalar_lea.vmem [#allocation6], %s176
        %s178 = smul.u32 2, %s24
        %p180 = scmp.eq.s32.totalorder %s24, 0
        // Predicated region
        $region33: #{tpu_custom_call.1} parent=27 // pred_check
          %p181 = pneg %p180
        $region34: #{tpu_custom_call.1} parent=27 // pred_check_branch
          %183 = sbr.rel (%p181) target = $region36
        $region35: #{tpu_custom_call.1} parent=27 // pred_region
          %v184 = vld [vmem:[%s156] sm:$0xff]
          %v185 = vld [vmem:[%s156 + $0x8] sm:$0xff]
          %v186 = vld [vmem:[%s156 + $0x10] sm:$0xff]
          %v187 = vld [vmem:[%s156 + $0x18] sm:$0xff]
          %v188 = vld [vmem:[%s156 + $0x20] sm:$0xff]
          %v189 = vld [vmem:[%s156 + $0x28] sm:$0xff]
          %v190 = vld [vmem:[%s156 + $0x30] sm:$0xff]
          %v191 = vld [vmem:[%s156 + $0x38] sm:$0xff]
          %v192 = vpack.c.bf16 %v186, %v184
          %v193 = vpack.c.bf16 %v187, %v185
          %v194 = vpack.c.bf16 %v190, %v188
          %v195 = vpack.c.bf16 %v191, %v189
          %v196 = vld [vmem:[%s1] sm:$0xf]
          %v197 = vld [vmem:[%s1 + $0x4] sm:$0xf]
          %v198 = vld [vmem:[%s1 + $0x8] sm:$0xf]
          %v199 = vld [vmem:[%s1 + $0xc] sm:$0xf]
          %v200 = vld [vmem:[%s1 + $0x10] sm:$0xf]
          %v201 = vld [vmem:[%s1 + $0x14] sm:$0xf]
          %v202 = vld [vmem:[%s1 + $0x18] sm:$0xf]
          %v203 = vld [vmem:[%s1 + $0x1c] sm:$0xf]
          %v204 = vld [vmem:[%s1 + $0x20] sm:$0xf]
          %v205 = vld [vmem:[%s1 + $0x24] sm:$0xf]
          %v206 = vld [vmem:[%s1 + $0x28] sm:$0xf]
          %v207 = vld [vmem:[%s1 + $0x2c] sm:$0xf]
          %v220 = vunpack.c.l.b16 %v196
          %v221 = vunpack.c.l.b16 %v197
          %v222 = vunpack.c.l.b16 %v198
          %v223 = vunpack.c.l.b16 %v199
          %v224 = vunpack.c.l.b16 %v200
          %v225 = vunpack.c.l.b16 %v201
          %v226 = vunpack.c.l.b16 %v202
          %v227 = vunpack.c.l.b16 %v203
          %v228 = vunpack.c.l.b16 %v204
          %v229 = vunpack.c.l.b16 %v205
          %v230 = vunpack.c.l.b16 %v206
          %v231 = vunpack.c.l.b16 %v207
          %v232 = vpack.c.b16 %v221, %v220
          %v233 = vpack.c.b16 %v223, %v222
          %v234 = vpack.c.b16 %v225, %v224
          %v235 = vpack.c.b16 %v227, %v226
          %v236 = vpack.c.b16 %v229, %v228
          %v237 = vpack.c.b16 %v231, %v230
          %vm238 = vcmask 261120
          %v240 = vsel %vm238, %v232, 0
          %v243 = vsel %vm238, %v233, 0
          %v246 = vsel %vm238, %v234, 0
          %v249 = vsel %vm238, %v235, 0
          %v252 = vsel %vm238, %v236, 0
          %v255 = vsel %vm238, %v237, 0
          %257 = vmatpush.bf16.msra.mxu0 0
          %258 = vmatpush.bf16.msra.mxu0 0
          %259 = vmatpush.bf16.msra.mxu0 0
          %260 = vmatpush.bf16.msra.mxu0 0
          %261 = vmatpush.bf16.msra.mxu0 0
          %262 = vmatpush.bf16.msra.mxu0 0
          %263 = vmatpush.bf16.msra.mxu0 %v194
          %264 = vmatpush.bf16.msra.mxu0 %v192
          %265 = vmatmul.bf16.gmra.mxu0 %v240
          %v266 = vpop.f32.mrf.mxu0
          %v267 = vadd.f32 0.0, %v266
          %v268 = vpop.f32.mrf.mxu0
          %v269 = vadd.f32 0.0, %v268
          %270 = vmatmul.bf16.gmra.mxu0 %v243
          %v271 = vpop.f32.mrf.mxu0
          %v272 = vadd.f32 0.0, %v271
          %v273 = vpop.f32.mrf.mxu0
          %v274 = vadd.f32 0.0, %v273
          %275 = vmatmul.bf16.gmra.mxu0 %v246
          %v276 = vpop.f32.mrf.mxu0
          %v277 = vadd.f32 0.0, %v276
          %v278 = vpop.f32.mrf.mxu0
          %v279 = vadd.f32 0.0, %v278
          %280 = vmatmul.bf16.gmra.mxu0 %v249
          %v281 = vpop.f32.mrf.mxu0
          %v282 = vadd.f32 0.0, %v281
          %v283 = vpop.f32.mrf.mxu0
          %v284 = vadd.f32 0.0, %v283
          %285 = vmatmul.bf16.gmra.mxu0 %v252
          %v286 = vpop.f32.mrf.mxu0
          %v287 = vadd.f32 0.0, %v286
          %v288 = vpop.f32.mrf.mxu0
          %v289 = vadd.f32 0.0, %v288
          %290 = vmatmul.bf16.gmra.mxu0 %v255
          %v291 = vpop.f32.mrf.mxu0
          %v292 = vadd.f32 0.0, %v291
          %v293 = vpop.f32.mrf.mxu0
          %v294 = vadd.f32 0.0, %v293
          %295 = vdwg.mxu0
          %296 = vmatpush.bf16.msra.mxu0 0
          %297 = vmatpush.bf16.msra.mxu0 0
          %298 = vmatpush.bf16.msra.mxu0 0
          %299 = vmatpush.bf16.msra.mxu0 0
          %300 = vmatpush.bf16.msra.mxu0 0
          %301 = vmatpush.bf16.msra.mxu0 0
          %302 = vmatpush.bf16.msra.mxu0 %v195
          %303 = vmatpush.bf16.msra.mxu0 %v193
          %304 = vmatmul.bf16.gmra.mxu0 %v240
          %v305 = vpop.f32.mrf.mxu0
          %v306 = vadd.f32 0.0, %v305
          %v307 = vpop.f32.mrf.mxu0
          %v308 = vadd.f32 0.0, %v307
          %309 = vmatmul.bf16.gmra.mxu0 %v243
          %v310 = vpop.f32.mrf.mxu0
          %v311 = vadd.f32 0.0, %v310
          %v312 = vpop.f32.mrf.mxu0
          %v313 = vadd.f32 0.0, %v312
          %314 = vmatmul.bf16.gmra.mxu0 %v246
          %v315 = vpop.f32.mrf.mxu0
          %v316 = vadd.f32 0.0, %v315
          %v317 = vpop.f32.mrf.mxu0
          %v318 = vadd.f32 0.0, %v317
          %319 = vmatmul.bf16.gmra.mxu0 %v249
          %v320 = vpop.f32.mrf.mxu0
          %v321 = vadd.f32 0.0, %v320
          %v322 = vpop.f32.mrf.mxu0
          %v323 = vadd.f32 0.0, %v322
          %324 = vmatmul.bf16.gmra.mxu0 %v252
          %v325 = vpop.f32.mrf.mxu0
          %v326 = vadd.f32 0.0, %v325
          %v327 = vpop.f32.mrf.mxu0
          %v328 = vadd.f32 0.0, %v327
          %329 = vmatmul.bf16.gmra.mxu0 %v255
          %v330 = vpop.f32.mrf.mxu0
          %v331 = vadd.f32 0.0, %v330
          %v332 = vpop.f32.mrf.mxu0
          %v333 = vadd.f32 0.0, %v332
          %334 = vdwg.mxu0
          %v335 = vpack.c.bf16 %v306, %v267
          %v336 = vpack.c.bf16 %v308, %v269
          %v337 = vpack.c.bf16 %v311, %v272
          %v338 = vpack.c.bf16 %v313, %v274
          %339 = vst [vmem:[#allocation2] sm:$0xff] %v335
          %340 = vst [vmem:[#allocation2 + $0x8] sm:$0xff] %v336
          %341 = vst [vmem:[#allocation2 + $0x10] sm:$0xff] %v337
          %342 = vst [vmem:[#allocation2 + $0x18] sm:$0xff] %v338
          %v343 = vpack.c.bf16 %v316, %v277
          %v344 = vpack.c.bf16 %v318, %v279
          %v345 = vpack.c.bf16 %v321, %v282
          %v346 = vpack.c.bf16 %v323, %v284
          %s347 = sadd.s32 0, 8
          %s348 = smul.addr %s347, 4
          %s349 = scalar_lea.vmem [#allocation2], %s348
          %350 = vst [vmem:[%s349] sm:$0xff] %v343
          %351 = vst [vmem:[%s349 + $0x8] sm:$0xff] %v344
          %352 = vst [vmem:[%s349 + $0x10] sm:$0xff] %v345
          %353 = vst [vmem:[%s349 + $0x18] sm:$0xff] %v346
          %v354 = vpack.c.bf16 %v326, %v287
          %v355 = vpack.c.bf16 %v328, %v289
          %v356 = vpack.c.bf16 %v331, %v292
          %v357 = vpack.c.bf16 %v333, %v294
          %s358 = sadd.s32 0, 16
          %s359 = smul.addr %s358, 4
          %s360 = scalar_lea.vmem [#allocation2], %s359
          %361 = vst [vmem:[%s360] sm:$0xff] %v354
          %362 = vst [vmem:[%s360 + $0x8] sm:$0xff] %v355
          %363 = vst [vmem:[%s360 + $0x10] sm:$0xff] %v356
          %364 = vst [vmem:[%s360 + $0x18] sm:$0xff] %v357
        $region36: #{tpu_custom_call.1} parent=27 // pred_fallthru
          _
        %s365 = smul.u32 %s24, 256
        %s366 = sshra.s32 %s365, 7
        %s367 = sand.u32 %s365, 127
        %s368 = smul.addr %s366, 4
        %s369 = scalar_lea.vmem [#allocation2], %s368
        %v370 = vld [vmem:[%s369] sm:$0xff]
        %v371 = vld [vmem:[%s369 + $0x8] sm:$0xff]
        %v372 = vld [vmem:[%s369 + $0x10] sm:$0xff]
        %v373 = vld [vmem:[%s369 + $0x18] sm:$0xff]
        %s374 = sadd.s32 0, 8
        %s375 = smul.addr %s374, 4
        %s376 = scalar_lea.vmem [#allocation2], %s375
        %v377 = vld [vmem:[%s376] sm:$0xff]
        %v378 = vld [vmem:[%s376 + $0x8] sm:$0xff]
        %v379 = vld [vmem:[%s376 + $0x10] sm:$0xff]
        %v380 = vld [vmem:[%s376 + $0x18] sm:$0xff]
        %s381 = sadd.s32 0, 16
        %s382 = smul.addr %s381, 4
        %s383 = scalar_lea.vmem [#allocation2], %s382
        %v384 = vld [vmem:[%s383] sm:$0xff]
        %v385 = vld [vmem:[%s383 + $0x8] sm:$0xff]
        %v386 = vld [vmem:[%s383 + $0x10] sm:$0xff]
        %v387 = vld [vmem:[%s383 + $0x18] sm:$0xff]
        %v392 = vunpack.c.l.b16 %v377
        %v393 = vunpack.c.h.b16 %v377
        %v394 = vunpack.c.l.b16 %v378
        %v395 = vunpack.c.h.b16 %v378
        %v396 = vunpack.c.l.b16 %v379
        %v397 = vunpack.c.h.b16 %v379
        %v398 = vunpack.c.l.b16 %v380
        %v399 = vunpack.c.h.b16 %v380
        %v400 = vpack.c.b16 %v394, %v392
        %v401 = vpack.c.b16 %v395, %v393
        %v402 = vpack.c.b16 %v398, %v396
        %v403 = vpack.c.b16 %v399, %v397
        %408 = vxpose.binary.xlu0.c.b16.start [1/16] %v401, %v400, 128
        %409 = vxpose.binary.xlu0.c.b16.cont [2/16] %v403, %v402, 128
        %410 = vxpose.binary.xlu0.c.b16.cont [3/16] 0, 0, 128
        %411 = vxpose.binary.xlu0.c.b16.cont [4/16] 0, 0, 128
        %412 = vxpose.binary.xlu0.c.b16.cont [5/16] 0, 0, 128
        %413 = vxpose.binary.xlu0.c.b16.cont [6/16] 0, 0, 128
        %414 = vxpose.binary.xlu0.c.b16.cont [7/16] 0, 0, 128
        %415 = vxpose.binary.xlu0.c.b16.end [8/16] 0, 0, 128
        %v416 = vpop.trf.xlu0
        %v417 = vpop.trf.xlu0
        %v418 = vpop.trf.xlu0
        %v419 = vpop.trf.xlu0
        %v420 = vpop.trf.xlu0
        %v421 = vpop.trf.xlu0
        %v422 = vpop.trf.xlu0
        %v423 = vpop.trf.xlu0
        %v424 = vpop.trf.xlu0
        %v425 = vpop.trf.xlu0
        %v426 = vpop.trf.xlu0
        %v427 = vpop.trf.xlu0
        %v428 = vpop.trf.xlu0
        %v429 = vpop.trf.xlu0
        %v430 = vpop.trf.xlu0
        %v431 = vpop.trf.xlu0
        %v436 = vunpack.c.l.b16 %v370
        %v437 = vunpack.c.h.b16 %v370
        %v438 = vunpack.c.l.b16 %v371
        %v439 = vunpack.c.h.b16 %v371
        %v440 = vunpack.c.l.b16 %v372
        %v441 = vunpack.c.h.b16 %v372
        %v442 = vunpack.c.l.b16 %v373
        %v443 = vunpack.c.h.b16 %v373
        %v444 = vpack.c.b16 %v438, %v436
        %v445 = vpack.c.b16 %v439, %v437
        %v446 = vpack.c.b16 %v442, %v440
        %v447 = vpack.c.b16 %v443, %v441
        %vm452 = vcmask 261120
        %v454 = vsel %vm452, %v416, 0
        %v457 = vsel %vm452, %v418, 0
        %v460 = vsel %vm452, %v420, 0
        %v463 = vsel %vm452, %v422, 0
        %v466 = vsel %vm452, %v424, 0
        %v469 = vsel %vm452, %v426, 0
        %v472 = vsel %vm452, %v428, 0
        %v475 = vsel %vm452, %v430, 0
        %v478 = vsel %vm452, %v417, 0
        %v481 = vsel %vm452, %v419, 0
        %v484 = vsel %vm452, %v421, 0
        %v487 = vsel %vm452, %v423, 0
        %v490 = vsel %vm452, %v425, 0
        %v493 = vsel %vm452, %v427, 0
        %v496 = vsel %vm452, %v429, 0
        %v499 = vsel %vm452, %v431, 0
        %501 = vmatpush.bf16.msra.mxu0 0
        %502 = vmatpush.bf16.msra.mxu0 0
        %503 = vmatpush.bf16.msra.mxu0 0
        %504 = vmatpush.bf16.msra.mxu0 0
        %505 = vmatpush.bf16.msra.mxu0 0
        %506 = vmatpush.bf16.msra.mxu0 0
        %507 = vmatpush.bf16.msra.mxu0 %v446
        %508 = vmatpush.bf16.msra.mxu0 %v444
        %509 = vmatmul.bf16.gmra.mxu0 %v454
        %v510 = vpop.f32.mrf.mxu0
        %v511 = vadd.f32 0.0, %v510
        %v512 = vpop.f32.mrf.mxu0
        %v513 = vadd.f32 0.0, %v512
        %514 = vmatmul.bf16.gmra.mxu0 %v457
        %v515 = vpop.f32.mrf.mxu0
        %v516 = vadd.f32 0.0, %v515
        %v517 = vpop.f32.mrf.mxu0
        %v518 = vadd.f32 0.0, %v517
        %519 = vmatmul.bf16.gmra.mxu0 %v460
        %v520 = vpop.f32.mrf.mxu0
        %v521 = vadd.f32 0.0, %v520
        %v522 = vpop.f32.mrf.mxu0
        %v523 = vadd.f32 0.0, %v522
        %524 = vmatmul.bf16.gmra.mxu0 %v463
        %v525 = vpop.f32.mrf.mxu0
        %v526 = vadd.f32 0.0, %v525
        %v527 = vpop.f32.mrf.mxu0
        %v528 = vadd.f32 0.0, %v527
        %529 = vmatmul.bf16.gmra.mxu0 %v466
        %v530 = vpop.f32.mrf.mxu0
        %v531 = vadd.f32 0.0, %v530
        %v532 = vpop.f32.mrf.mxu0
        %v533 = vadd.f32 0.0, %v532
        %534 = vmatmul.bf16.gmra.mxu0 %v469
        %v535 = vpop.f32.mrf.mxu0
        %v536 = vadd.f32 0.0, %v535
        %v537 = vpop.f32.mrf.mxu0
        %v538 = vadd.f32 0.0, %v537
        %539 = vmatmul.bf16.gmra.mxu0 %v472
        %v540 = vpop.f32.mrf.mxu0
        %v541 = vadd.f32 0.0, %v540
        %v542 = vpop.f32.mrf.mxu0
        %v543 = vadd.f32 0.0, %v542
        %544 = vmatmul.bf16.gmra.mxu0 %v475
        %v545 = vpop.f32.mrf.mxu0
        %v546 = vadd.f32 0.0, %v545
        %v547 = vpop.f32.mrf.mxu0
        %v548 = vadd.f32 0.0, %v547
        %549 = vmatmul.bf16.gmra.mxu0 %v478
        %v550 = vpop.f32.mrf.mxu0
        %v551 = vadd.f32 0.0, %v550
        %v552 = vpop.f32.mrf.mxu0
        %v553 = vadd.f32 0.0, %v552
        %554 = vmatmul.bf16.gmra.mxu0 %v481
        %v555 = vpop.f32.mrf.mxu0
        %v556 = vadd.f32 0.0, %v555
        %v557 = vpop.f32.mrf.mxu0
        %v558 = vadd.f32 0.0, %v557
        %559 = vmatmul.bf16.gmra.mxu0 %v484
        %v560 = vpop.f32.mrf.mxu0
        %v561 = vadd.f32 0.0, %v560
        %v562 = vpop.f32.mrf.mxu0
        %v563 = vadd.f32 0.0, %v562
        %564 = vmatmul.bf16.gmra.mxu0 %v487
        %v565 = vpop.f32.mrf.mxu0
        %v566 = vadd.f32 0.0, %v565
        %v567 = vpop.f32.mrf.mxu0
        %v568 = vadd.f32 0.0, %v567
        %569 = vmatmul.bf16.gmra.mxu0 %v490
        %v570 = vpop.f32.mrf.mxu0
        %v571 = vadd.f32 0.0, %v570
        %v572 = vpop.f32.mrf.mxu0
        %v573 = vadd.f32 0.0, %v572
        %574 = vmatmul.bf16.gmra.mxu0 %v493
        %v575 = vpop.f32.mrf.mxu0
        %v576 = vadd.f32 0.0, %v575
        %v577 = vpop.f32.mrf.mxu0
        %v578 = vadd.f32 0.0, %v577
        %579 = vmatmul.bf16.gmra.mxu0 %v496
        %v580 = vpop.f32.mrf.mxu0
        %v581 = vadd.f32 0.0, %v580
        %v582 = vpop.f32.mrf.mxu0
        %v583 = vadd.f32 0.0, %v582
        %584 = vmatmul.bf16.gmra.mxu0 %v499
        %v585 = vpop.f32.mrf.mxu0
        %v586 = vadd.f32 0.0, %v585
        %v587 = vpop.f32.mrf.mxu0
        %v588 = vadd.f32 0.0, %v587
        %589 = vdwg.mxu0
        %590 = vmatpush.bf16.msra.mxu0 0
        %591 = vmatpush.bf16.msra.mxu0 0
        %592 = vmatpush.bf16.msra.mxu0 0
        %593 = vmatpush.bf16.msra.mxu0 0
        %594 = vmatpush.bf16.msra.mxu0 0
        %595 = vmatpush.bf16.msra.mxu0 0
        %596 = vmatpush.bf16.msra.mxu0 %v447
        %597 = vmatpush.bf16.msra.mxu0 %v445
        %598 = vmatmul.bf16.gmra.mxu0 %v454
        %v599 = vpop.f32.mrf.mxu0
        %v600 = vadd.f32 0.0, %v599
        %v601 = vpop.f32.mrf.mxu0
        %v602 = vadd.f32 0.0, %v601
        %603 = vmatmul.bf16.gmra.mxu0 %v457
        %v604 = vpop.f32.mrf.mxu0
        %v605 = vadd.f32 0.0, %v604
        %v606 = vpop.f32.mrf.mxu0
        %v607 = vadd.f32 0.0, %v606
        %608 = vmatmul.bf16.gmra.mxu0 %v460
        %v609 = vpop.f32.mrf.mxu0
        %v610 = vadd.f32 0.0, %v609
        %v611 = vpop.f32.mrf.mxu0
        %v612 = vadd.f32 0.0, %v611
        %613 = vmatmul.bf16.gmra.mxu0 %v463
        %v614 = vpop.f32.mrf.mxu0
        %v615 = vadd.f32 0.0, %v614
        %v616 = vpop.f32.mrf.mxu0
        %v617 = vadd.f32 0.0, %v616
        %618 = vmatmul.bf16.gmra.mxu0 %v466
        %v619 = vpop.f32.mrf.mxu0
        %v620 = vadd.f32 0.0, %v619
        %v621 = vpop.f32.mrf.mxu0
        %v622 = vadd.f32 0.0, %v621
        %623 = vmatmul.bf16.gmra.mxu0 %v469
        %v624 = vpop.f32.mrf.mxu0
        %v625 = vadd.f32 0.0, %v624
        %v626 = vpop.f32.mrf.mxu0
        %v627 = vadd.f32 0.0, %v626
        %628 = vmatmul.bf16.gmra.mxu0 %v472
        %v629 = vpop.f32.mrf.mxu0
        %v630 = vadd.f32 0.0, %v629
        %v631 = vpop.f32.mrf.mxu0
        %v632 = vadd.f32 0.0, %v631
        %633 = vmatmul.bf16.gmra.mxu0 %v475
        %v634 = vpop.f32.mrf.mxu0
        %v635 = vadd.f32 0.0, %v634
        %v636 = vpop.f32.mrf.mxu0
        %v637 = vadd.f32 0.0, %v636
        %638 = vmatmul.bf16.gmra.mxu0 %v478
        %v639 = vpop.f32.mrf.mxu0
        %v640 = vadd.f32 0.0, %v639
        %v641 = vpop.f32.mrf.mxu0
        %v642 = vadd.f32 0.0, %v641
        %643 = vmatmul.bf16.gmra.mxu0 %v481
        %v644 = vpop.f32.mrf.mxu0
        %v645 = vadd.f32 0.0, %v644
        %v646 = vpop.f32.mrf.mxu0
        %v647 = vadd.f32 0.0, %v646
        %648 = vmatmul.bf16.gmra.mxu0 %v484
        %v649 = vpop.f32.mrf.mxu0
        %v650 = vadd.f32 0.0, %v649
        %v651 = vpop.f32.mrf.mxu0
        %v652 = vadd.f32 0.0, %v651
        %653 = vmatmul.bf16.gmra.mxu0 %v487
        %v654 = vpop.f32.mrf.mxu0
        %v655 = vadd.f32 0.0, %v654
        %v656 = vpop.f32.mrf.mxu0
        %v657 = vadd.f32 0.0, %v656
        %658 = vmatmul.bf16.gmra.mxu0 %v490
        %v659 = vpop.f32.mrf.mxu0
        %v660 = vadd.f32 0.0, %v659
        %v661 = vpop.f32.mrf.mxu0
        %v662 = vadd.f32 0.0, %v661
        %663 = vmatmul.bf16.gmra.mxu0 %v493
        %v664 = vpop.f32.mrf.mxu0
        %v665 = vadd.f32 0.0, %v664
        %v666 = vpop.f32.mrf.mxu0
        %v667 = vadd.f32 0.0, %v666
        %668 = vmatmul.bf16.gmra.mxu0 %v496
        %v669 = vpop.f32.mrf.mxu0
        %v670 = vadd.f32 0.0, %v669
        %v671 = vpop.f32.mrf.mxu0
        %v672 = vadd.f32 0.0, %v671
        %673 = vmatmul.bf16.gmra.mxu0 %v499
        %v674 = vpop.f32.mrf.mxu0
        %v675 = vadd.f32 0.0, %v674
        %v676 = vpop.f32.mrf.mxu0
        %v677 = vadd.f32 0.0, %v676
        %678 = vdwg.mxu0
        %v679 = vmax.f32 %v511, %v516
        %v680 = vmax.f32 %v513, %v518
        %v681 = vmax.f32 %v679, %v521
        %v682 = vmax.f32 %v680, %v523
        %v683 = vmax.f32 %v681, %v526
        %v684 = vmax.f32 %v682, %v528
        %v685 = vmax.f32 %v683, %v531
        %v686 = vmax.f32 %v684, %v533
        %v687 = vmax.f32 %v685, %v536
        %v688 = vmax.f32 %v686, %v538
        %v689 = vmax.f32 %v687, %v541
        %v690 = vmax.f32 %v688, %v543
        %v691 = vmax.f32 %v689, %v546
        %v692 = vmax.f32 %v690, %v548
        %v693 = vmax.f32 %v691, %v551
        %v694 = vmax.f32 %v692, %v553
        %v695 = vmax.f32 %v693, %v556
        %v696 = vmax.f32 %v694, %v558
        %v697 = vmax.f32 %v695, %v561
        %v698 = vmax.f32 %v696, %v563
        %v699 = vmax.f32 %v697, %v566
        %v700 = vmax.f32 %v698, %v568
        %v701 = vmax.f32 %v699, %v571
        %v702 = vmax.f32 %v700, %v573
        %v703 = vmax.f32 %v701, %v576
        %v704 = vmax.f32 %v702, %v578
        %v705 = vmax.f32 %v703, %v581
        %v706 = vmax.f32 %v704, %v583
        %v707 = vmax.f32 %v705, %v586
        %v708 = vmax.f32 %v706, %v588
        %v709 = vmax.f32 %v707, %v708
        %v710 = vrot.slane %v709, 4
        %v711 = vmax.f32 %v709, %v710
        %v712 = vrot.slane %v711, 2
        %v713 = vmax.f32 %v711, %v712
        %v714 = vrot.slane %v713, 1
        %v715 = vmax.f32 %v713, %v714
        %v716 = vmax.f32 %v600, %v605
        %v717 = vmax.f32 %v602, %v607
        %v718 = vmax.f32 %v716, %v610
        %v719 = vmax.f32 %v717, %v612
        %v720 = vmax.f32 %v718, %v615
        %v721 = vmax.f32 %v719, %v617
        %v722 = vmax.f32 %v720, %v620
        %v723 = vmax.f32 %v721, %v622
        %v724 = vmax.f32 %v722, %v625
        %v725 = vmax.f32 %v723, %v627
        %v726 = vmax.f32 %v724, %v630
        %v727 = vmax.f32 %v725, %v632
        %v728 = vmax.f32 %v726, %v635
        %v729 = vmax.f32 %v727, %v637
        %v730 = vmax.f32 %v728, %v640
        %v731 = vmax.f32 %v729, %v642
        %v732 = vmax.f32 %v730, %v645
        %v733 = vmax.f32 %v731, %v647
        %v734 = vmax.f32 %v732, %v650
        %v735 = vmax.f32 %v733, %v652
        %v736 = vmax.f32 %v734, %v655
        %v737 = vmax.f32 %v735, %v657
        %v738 = vmax.f32 %v736, %v660
        %v739 = vmax.f32 %v737, %v662
        %v740 = vmax.f32 %v738, %v665
        %v741 = vmax.f32 %v739, %v667
        %v742 = vmax.f32 %v740, %v670
        %v743 = vmax.f32 %v741, %v672
        %v744 = vmax.f32 %v742, %v675
        %v745 = vmax.f32 %v743, %v677
        %v746 = vmax.f32 %v744, %v745
        %v747 = vrot.slane %v746, 4
        %v748 = vmax.f32 %v746, %v747
        %v749 = vrot.slane %v748, 2
        %v750 = vmax.f32 %v748, %v749
        %v751 = vrot.slane %v750, 1
        %v752 = vmax.f32 %v750, %v751
        %v753 = vsub.f32 -inf, %v715
        %v754 = vsub.f32 -inf, %v752
        %v755 = vmul.f32 %v753, 1.442695
        %v756 = vpow.pop %v755
        %v757 = vmul.f32 %v754, 1.442695
        %v758 = vpow.pop %v757
        %v759 = vsub.f32 %v511, %v715
        %v760 = vsub.f32 %v600, %v752
        %v761 = vsub.f32 %v513, %v715
        %v762 = vsub.f32 %v602, %v752
        %v763 = vsub.f32 %v516, %v715
        %v764 = vsub.f32 %v605, %v752
        %v765 = vsub.f32 %v518, %v715
        %v766 = vsub.f32 %v607, %v752
        %v767 = vsub.f32 %v521, %v715
        %v768 = vsub.f32 %v610, %v752
        %v769 = vsub.f32 %v523, %v715
        %v770 = vsub.f32 %v612, %v752
        %v771 = vsub.f32 %v526, %v715
        %v772 = vsub.f32 %v615, %v752
        %v773 = vsub.f32 %v528, %v715
        %v774 = vsub.f32 %v617, %v752
        %v775 = vsub.f32 %v531, %v715
        %v776 = vsub.f32 %v620, %v752
        %v777 = vsub.f32 %v533, %v715
        %v778 = vsub.f32 %v622, %v752
        %v779 = vsub.f32 %v536, %v715
        %v780 = vsub.f32 %v625, %v752
        %v781 = vsub.f32 %v538, %v715
        %v782 = vsub.f32 %v627, %v752
        %v783 = vsub.f32 %v541, %v715
        %v784 = vsub.f32 %v630, %v752
        %v785 = vsub.f32 %v543, %v715
        %v786 = vsub.f32 %v632, %v752
        %v787 = vsub.f32 %v546, %v715
        %v788 = vsub.f32 %v635, %v752
        %v789 = vsub.f32 %v548, %v715
        %v790 = vsub.f32 %v637, %v752
        %v791 = vsub.f32 %v551, %v715
        %v792 = vsub.f32 %v640, %v752
        %v793 = vsub.f32 %v553, %v715
        %v794 = vsub.f32 %v642, %v752
        %v795 = vsub.f32 %v556, %v715
        %v796 = vsub.f32 %v645, %v752
        %v797 = vsub.f32 %v558, %v715
        %v798 = vsub.f32 %v647, %v752
        %v799 = vsub.f32 %v561, %v715
        %v800 = vsub.f32 %v650, %v752
        %v801 = vsub.f32 %v563, %v715
        %v802 = vsub.f32 %v652, %v752
        %v803 = vsub.f32 %v566, %v715
        %v804 = vsub.f32 %v655, %v752
        %v805 = vsub.f32 %v568, %v715
        %v806 = vsub.f32 %v657, %v752
        %v807 = vsub.f32 %v571, %v715
        %v808 = vsub.f32 %v660, %v752
        %v809 = vsub.f32 %v573, %v715
        %v810 = vsub.f32 %v662, %v752
        %v811 = vsub.f32 %v576, %v715
        %v812 = vsub.f32 %v665, %v752
        %v813 = vsub.f32 %v578, %v715
        %v814 = vsub.f32 %v667, %v752
        %v815 = vsub.f32 %v581, %v715
        %v816 = vsub.f32 %v670, %v752
        %v817 = vsub.f32 %v583, %v715
        %v818 = vsub.f32 %v672, %v752
        %v819 = vsub.f32 %v586, %v715
        %v820 = vsub.f32 %v675, %v752
        %v821 = vsub.f32 %v588, %v715
        %v822 = vsub.f32 %v677, %v752
        %v823 = vmul.f32 %v759, 1.442695
        %v824 = vpow.pop %v823
        %v825 = vmul.f32 %v760, 1.442695
        %v826 = vpow.pop %v825
        %v827 = vmul.f32 %v761, 1.442695
        %v828 = vpow.pop %v827
        %v829 = vmul.f32 %v762, 1.442695
        %v830 = vpow.pop %v829
        %v831 = vmul.f32 %v763, 1.442695
        %v832 = vpow.pop %v831
        %v833 = vmul.f32 %v764, 1.442695
        %v834 = vpow.pop %v833
        %v835 = vmul.f32 %v765, 1.442695
        %v836 = vpow.pop %v835
        %v837 = vmul.f32 %v766, 1.442695
        %v838 = vpow.pop %v837
        %v839 = vmul.f32 %v767, 1.442695
        %v840 = vpow.pop %v839
        %v841 = vmul.f32 %v768, 1.442695
        %v842 = vpow.pop %v841
        %v843 = vmul.f32 %v769, 1.442695
        %v844 = vpow.pop %v843
        %v845 = vmul.f32 %v770, 1.442695
        %v846 = vpow.pop %v845
        %v847 = vmul.f32 %v771, 1.442695
        %v848 = vpow.pop %v847
        %v849 = vmul.f32 %v772, 1.442695
        %v850 = vpow.pop %v849
        %v851 = vmul.f32 %v773, 1.442695
        %v852 = vpow.pop %v851
        %v853 = vmul.f32 %v774, 1.442695
        %v854 = vpow.pop %v853
        %v855 = vmul.f32 %v775, 1.442695
        %v856 = vpow.pop %v855
        %v857 = vmul.f32 %v776, 1.442695
        %v858 = vpow.pop %v857
        %v859 = vmul.f32 %v777, 1.442695
        %v860 = vpow.pop %v859
        %v861 = vmul.f32 %v778, 1.442695
        %v862 = vpow.pop %v861
        %v863 = vmul.f32 %v779, 1.442695
        %v864 = vpow.pop %v863
        %v865 = vmul.f32 %v780, 1.442695
        %v866 = vpow.pop %v865
        %v867 = vmul.f32 %v781, 1.442695
        %v868 = vpow.pop %v867
        %v869 = vmul.f32 %v782, 1.442695
        %v870 = vpow.pop %v869
        %v871 = vmul.f32 %v783, 1.442695
        %v872 = vpow.pop %v871
        %v873 = vmul.f32 %v784, 1.442695
        %v874 = vpow.pop %v873
        %v875 = vmul.f32 %v785, 1.442695
        %v876 = vpow.pop %v875
        %v877 = vmul.f32 %v786, 1.442695
        %v878 = vpow.pop %v877
        %v879 = vmul.f32 %v787, 1.442695
        %v880 = vpow.pop %v879
        %v881 = vmul.f32 %v788, 1.442695
        %v882 = vpow.pop %v881
        %v883 = vmul.f32 %v789, 1.442695
        %v884 = vpow.pop %v883
        %v885 = vmul.f32 %v790, 1.442695
        %v886 = vpow.pop %v885
        %v887 = vmul.f32 %v791, 1.442695
        %v888 = vpow.pop %v887
        %v889 = vmul.f32 %v792, 1.442695
        %v890 = vpow.pop %v889
        %v891 = vmul.f32 %v793, 1.442695
        %v892 = vpow.pop %v891
        %v893 = vmul.f32 %v794, 1.442695
        %v894 = vpow.pop %v893
        %v895 = vmul.f32 %v795, 1.442695
        %v896 = vpow.pop %v895
        %v897 = vmul.f32 %v796, 1.442695
        %v898 = vpow.pop %v897
        %v899 = vmul.f32 %v797, 1.442695
        %v900 = vpow.pop %v899
        %v901 = vmul.f32 %v798, 1.442695
        %v902 = vpow.pop %v901
        %v903 = vmul.f32 %v799, 1.442695
        %v904 = vpow.pop %v903
        %v905 = vmul.f32 %v800, 1.442695
        %v906 = vpow.pop %v905
        %v907 = vmul.f32 %v801, 1.442695
        %v908 = vpow.pop %v907
        %v909 = vmul.f32 %v802, 1.442695
        %v910 = vpow.pop %v909
        %v911 = vmul.f32 %v803, 1.442695
        %v912 = vpow.pop %v911
        %v913 = vmul.f32 %v804, 1.442695
        %v914 = vpow.pop %v913
        %v915 = vmul.f32 %v805, 1.442695
        %v916 = vpow.pop %v915
        %v917 = vmul.f32 %v806, 1.442695
        %v918 = vpow.pop %v917
        %v919 = vmul.f32 %v807, 1.442695
        %v920 = vpow.pop %v919
        %v921 = vmul.f32 %v808, 1.442695
        %v922 = vpow.pop %v921
        %v923 = vmul.f32 %v809, 1.442695
        %v924 = vpow.pop %v923
        %v925 = vmul.f32 %v810, 1.442695
        %v926 = vpow.pop %v925
        %v927 = vmul.f32 %v811, 1.442695
        %v928 = vpow.pop %v927
        %v929 = vmul.f32 %v812, 1.442695
        %v930 = vpow.pop %v929
        %v931 = vmul.f32 %v813, 1.442695
        %v932 = vpow.pop %v931
        %v933 = vmul.f32 %v814, 1.442695
        %v934 = vpow.pop %v933
        %v935 = vmul.f32 %v815, 1.442695
        %v936 = vpow.pop %v935
        %v937 = vmul.f32 %v816, 1.442695
        %v938 = vpow.pop %v937
        %v939 = vmul.f32 %v817, 1.442695
        %v940 = vpow.pop %v939
        %v941 = vmul.f32 %v818, 1.442695
        %v942 = vpow.pop %v941
        %v943 = vmul.f32 %v819, 1.442695
        %v944 = vpow.pop %v943
        %v945 = vmul.f32 %v820, 1.442695
        %v946 = vpow.pop %v945
        %v947 = vmul.f32 %v821, 1.442695
        %v948 = vpow.pop %v947
        %v949 = vmul.f32 %v822, 1.442695
        %v950 = vpow.pop %v949
        %v951 = vmul.f32 %v756, 0.0
        %v952 = vmul.f32 %v758, 0.0
        %v953 = vadd.f32 %v824, %v828
        %v954 = vadd.f32 %v953, %v832
        %v955 = vadd.f32 %v954, %v836
        %v956 = vadd.f32 %v955, %v840
        %v957 = vadd.f32 %v956, %v844
        %v958 = vadd.f32 %v957, %v848
        %v959 = vadd.f32 %v958, %v852
        %v960 = vadd.f32 %v959, %v856
        %v961 = vadd.f32 %v960, %v860
        %v962 = vadd.f32 %v961, %v864
        %v963 = vadd.f32 %v962, %v868
        %v964 = vadd.f32 %v963, %v872
        %v965 = vadd.f32 %v964, %v876
        %v966 = vadd.f32 %v965, %v880
        %v967 = vadd.f32 %v966, %v884
        %v968 = vadd.f32 %v967, %v888
        %v969 = vadd.f32 %v968, %v892
        %v970 = vadd.f32 %v969, %v896
        %v971 = vadd.f32 %v970, %v900
        %v972 = vadd.f32 %v971, %v904
        %v973 = vadd.f32 %v972, %v908
        %v974 = vadd.f32 %v973, %v912
        %v975 = vadd.f32 %v974, %v916
        %v976 = vadd.f32 %v975, %v920
        %v977 = vadd.f32 %v976, %v924
        %v978 = vadd.f32 %v977, %v928
        %v979 = vadd.f32 %v978, %v932
        %v980 = vadd.f32 %v979, %v936
        %v981 = vadd.f32 %v980, %v940
        %v982 = vadd.f32 %v981, %v944
        %v983 = vadd.f32 %v982, %v948
        %v984 = vrot.slane %v983, 4
        %v985 = vadd.f32 %v983, %v984
        %v986 = vrot.slane %v985, 2
        %v987 = vadd.f32 %v985, %v986
        %v988 = vrot.slane %v987, 1
        %v989 = vadd.f32 %v987, %v988
        %v990 = vadd.f32 %v826, %v830
        %v991 = vadd.f32 %v990, %v834
        %v992 = vadd.f32 %v991, %v838
        %v993 = vadd.f32 %v992, %v842
        %v994 = vadd.f32 %v993, %v846
        %v995 = vadd.f32 %v994, %v850
        %v996 = vadd.f32 %v995, %v854
        %v997 = vadd.f32 %v996, %v858
        %v998 = vadd.f32 %v997, %v862
        %v999 = vadd.f32 %v998, %v866
        %v1000 = vadd.f32 %v999, %v870
        %v1001 = vadd.f32 %v1000, %v874
        %v1002 = vadd.f32 %v1001, %v878
        %v1003 = vadd.f32 %v1002, %v882
        %v1004 = vadd.f32 %v1003, %v886
        %v1005 = vadd.f32 %v1004, %v890
        %v1006 = vadd.f32 %v1005, %v894
        %v1007 = vadd.f32 %v1006, %v898
        %v1008 = vadd.f32 %v1007, %v902
        %v1009 = vadd.f32 %v1008, %v906
        %v1010 = vadd.f32 %v1009, %v910
        %v1011 = vadd.f32 %v1010, %v914
        %v1012 = vadd.f32 %v1011, %v918
        %v1013 = vadd.f32 %v1012, %v922
        %v1014 = vadd.f32 %v1013, %v926
        %v1015 = vadd.f32 %v1014, %v930
        %v1016 = vadd.f32 %v1015, %v934
        %v1017 = vadd.f32 %v1016, %v938
        %v1018 = vadd.f32 %v1017, %v942
        %v1019 = vadd.f32 %v1018, %v946
        %v1020 = vadd.f32 %v1019, %v950
        %v1021 = vrot.slane %v1020, 4
        %v1022 = vadd.f32 %v1020, %v1021
        %v1023 = vrot.slane %v1022, 2
        %v1024 = vadd.f32 %v1022, %v1023
        %v1025 = vrot.slane %v1024, 1
        %v1026 = vadd.f32 %v1024, %v1025
        %v1027 = vadd.f32 %v951, %v989
        %v1028 = vadd.f32 %v952, %v1026
        %v1029 = vpack.c.bf16 %v828, %v824
        %v1030 = vpack.c.bf16 %v830, %v826
        %v1031 = vpack.c.bf16 %v836, %v832
        %v1032 = vpack.c.bf16 %v838, %v834
        %v1033 = vpack.c.bf16 %v844, %v840
        %v1034 = vpack.c.bf16 %v846, %v842
        %v1035 = vpack.c.bf16 %v852, %v848
        %v1036 = vpack.c.bf16 %v854, %v850
        %v1037 = vpack.c.bf16 %v860, %v856
        %v1038 = vpack.c.bf16 %v862, %v858
        %v1039 = vpack.c.bf16 %v868, %v864
        %v1040 = vpack.c.bf16 %v870, %v866
        %v1041 = vpack.c.bf16 %v876, %v872
        %v1042 = vpack.c.bf16 %v878, %v874
        %v1043 = vpack.c.bf16 %v884, %v880
        %v1044 = vpack.c.bf16 %v886, %v882
        %v1045 = vpack.c.bf16 %v892, %v888
        %v1046 = vpack.c.bf16 %v894, %v890
        %v1047 = vpack.c.bf16 %v900, %v896
        %v1048 = vpack.c.bf16 %v902, %v898
        %v1049 = vpack.c.bf16 %v908, %v904
        %v1050 = vpack.c.bf16 %v910, %v906
        %v1051 = vpack.c.bf16 %v916, %v912
        %v1052 = vpack.c.bf16 %v918, %v914
        %v1053 = vpack.c.bf16 %v924, %v920
        %v1054 = vpack.c.bf16 %v926, %v922
        %v1055 = vpack.c.bf16 %v932, %v928
        %v1056 = vpack.c.bf16 %v934, %v930
        %v1057 = vpack.c.bf16 %v940, %v936
        %v1058 = vpack.c.bf16 %v942, %v938
        %v1059 = vpack.c.bf16 %v948, %v944
        %v1060 = vpack.c.bf16 %v950, %v946
        %v1065 = vunpack.c.l.b16 %v384
        %v1066 = vunpack.c.h.b16 %v384
        %v1067 = vunpack.c.l.b16 %v385
        %v1068 = vunpack.c.h.b16 %v385
        %v1069 = vunpack.c.l.b16 %v386
        %v1070 = vunpack.c.h.b16 %v386
        %v1071 = vunpack.c.l.b16 %v387
        %v1072 = vunpack.c.h.b16 %v387
        %v1073 = vpack.c.b16 %v1067, %v1065
        %v1074 = vpack.c.b16 %v1068, %v1066
        %v1075 = vpack.c.b16 %v1071, %v1069
        %v1076 = vpack.c.b16 %v1072, %v1070
        %1081 = vmatpush.bf16.msra.mxu0 %v1043
        %1082 = vmatpush.bf16.msra.mxu0 %v1041
        %1083 = vmatpush.bf16.msra.mxu0 %v1039
        %1084 = vmatpush.bf16.msra.mxu0 %v1037
        %1085 = vmatpush.bf16.msra.mxu0 %v1035
        %1086 = vmatpush.bf16.msra.mxu0 %v1033
        %1087 = vmatpush.bf16.msra.mxu0 %v1031
        %1088 = vmatpush.bf16.msra.mxu0 %v1029
        %1089 = vmatmul.bf16.gmra.mxu0 %v1073
        %v1090 = vpop.f32.mrf.mxu0
        %v1091 = vadd.f32 0.0, %v1090
        %v1092 = vpop.f32.mrf.mxu0
        %v1093 = vadd.f32 0.0, %v1092
        %1094 = vmatmul.bf16.gmra.mxu0 %v1075
        %v1095 = vpop.f32.mrf.mxu0
        %v1096 = vadd.f32 0.0, %v1095
        %v1097 = vpop.f32.mrf.mxu0
        %v1098 = vadd.f32 0.0, %v1097
        %1099 = vdwg.mxu0
        %1100 = vmatpush.bf16.msra.mxu0 %v1059
        %1101 = vmatpush.bf16.msra.mxu0 %v1057
        %1102 = vmatpush.bf16.msra.mxu0 %v1055
        %1103 = vmatpush.bf16.msra.mxu0 %v1053
        %1104 = vmatpush.bf16.msra.mxu0 %v1051
        %1105 = vmatpush.bf16.msra.mxu0 %v1049
        %1106 = vmatpush.bf16.msra.mxu0 %v1047
        %1107 = vmatpush.bf16.msra.mxu0 %v1045
        %1108 = vmatmul.bf16.gmra.mxu0 %v1074
        %v1109 = vpop.f32.mrf.mxu0
        %v1110 = vadd.f32 %v1091, %v1109
        %v1111 = vpop.f32.mrf.mxu0
        %v1112 = vadd.f32 %v1093, %v1111
        %1113 = vmatmul.bf16.gmra.mxu0 %v1076
        %v1114 = vpop.f32.mrf.mxu0
        %v1115 = vadd.f32 %v1096, %v1114
        %v1116 = vpop.f32.mrf.mxu0
        %v1117 = vadd.f32 %v1098, %v1116
        %1118 = vdwg.mxu0
        %1119 = vmatpush.bf16.msra.mxu0 %v1044
        %1120 = vmatpush.bf16.msra.mxu0 %v1042
        %1121 = vmatpush.bf16.msra.mxu0 %v1040
        %1122 = vmatpush.bf16.msra.mxu0 %v1038
        %1123 = vmatpush.bf16.msra.mxu0 %v1036
        %1124 = vmatpush.bf16.msra.mxu0 %v1034
        %1125 = vmatpush.bf16.msra.mxu0 %v1032
        %1126 = vmatpush.bf16.msra.mxu0 %v1030
        %1127 = vmatmul.bf16.gmra.mxu0 %v1073
        %v1128 = vpop.f32.mrf.mxu0
        %v1129 = vadd.f32 0.0, %v1128
        %v1130 = vpop.f32.mrf.mxu0
        %v1131 = vadd.f32 0.0, %v1130
        %1132 = vmatmul.bf16.gmra.mxu0 %v1075
        %v1133 = vpop.f32.mrf.mxu0
        %v1134 = vadd.f32 0.0, %v1133
        %v1135 = vpop.f32.mrf.mxu0
        %v1136 = vadd.f32 0.0, %v1135
        %1137 = vdwg.mxu0
        %1138 = vmatpush.bf16.msra.mxu0 %v1060
        %1139 = vmatpush.bf16.msra.mxu0 %v1058
        %1140 = vmatpush.bf16.msra.mxu0 %v1056
        %1141 = vmatpush.bf16.msra.mxu0 %v1054
        %1142 = vmatpush.bf16.msra.mxu0 %v1052
        %1143 = vmatpush.bf16.msra.mxu0 %v1050
        %1144 = vmatpush.bf16.msra.mxu0 %v1048
        %1145 = vmatpush.bf16.msra.mxu0 %v1046
        %1146 = vmatmul.bf16.gmra.mxu0 %v1074
        %v1147 = vpop.f32.mrf.mxu0
        %v1148 = vadd.f32 %v1129, %v1147
        %v1149 = vpop.f32.mrf.mxu0
        %v1150 = vadd.f32 %v1131, %v1149
        %1151 = vmatmul.bf16.gmra.mxu0 %v1076
        %v1152 = vpop.f32.mrf.mxu0
        %v1153 = vadd.f32 %v1134, %v1152
        %v1154 = vpop.f32.mrf.mxu0
        %v1155 = vadd.f32 %v1136, %v1154
        %1156 = vdwg.mxu0
        %v1157 = vadd.f32 %v951, %v1110
        %v1158 = vadd.f32 %v952, %v1148
        %v1159 = vadd.f32 %v951, %v1112
        %v1160 = vadd.f32 %v952, %v1150
        %v1161 = vadd.f32 %v951, %v1115
        %v1162 = vadd.f32 %v952, %v1153
        %v1163 = vadd.f32 %v951, %v1117
        %v1164 = vadd.f32 %v952, %v1155
        %v1165 = vrcp.pop %v1027
        %v1166 = vrcp.pop %v1028
        %v1167 = vmul.f32 %v1157, %v1165
        %v1168 = vmul.f32 %v1158, %v1166
        %v1169 = vmul.f32 %v1159, %v1165
        %v1170 = vmul.f32 %v1160, %v1166
        %v1171 = vmul.f32 %v1161, %v1165
        %v1172 = vmul.f32 %v1162, %v1166
        %v1173 = vmul.f32 %v1163, %v1165
        %v1174 = vmul.f32 %v1164, %v1166
        %1175 = vst [vmem:[%s177] sm:$0xff] %v1167
        %1176 = vst [vmem:[%s177 + $0x8] sm:$0xff] %v1168
        %1177 = vst [vmem:[%s177 + $0x10] sm:$0xff] %v1169
        %1178 = vst [vmem:[%s177 + $0x18] sm:$0xff] %v1170
        %1179 = vst [vmem:[%s177 + $0x20] sm:$0xff] %v1171
        %1180 = vst [vmem:[%s177 + $0x28] sm:$0xff] %v1172
        %1181 = vst [vmem:[%s177 + $0x30] sm:$0xff] %v1173
        %1182 = vst [vmem:[%s177 + $0x38] sm:$0xff] %v1174
        %s1183 = sand.u32 %s88, 1
        %s1184 = scalar_lea.sflag [#allocation5], %s1183
        %s1185 = sand.u32 %s88, 1
        %s1186 = smul.addr %s1185, 64
        %s1187 = scalar_lea.vmem [#allocation6], %s1186
        // Predicated region
        $region37: #{tpu_custom_call.1} parent=27 // pred_check
          %p1188 = pneg %p98
        $region38: #{tpu_custom_call.1} parent=27 // pred_check_branch
          %1190 = sbr.rel (%p1188) target = $region40
        $region39: #{tpu_custom_call.1} parent=27 // pred_region
          %s1191 = smul.u32 2, %s24
          %1193 = vsyncadd %s1184, 0
          %s1194 = smul.addr %s23, 8
          %s1195 = sadd.s32 %s1191, %s1194
          %s1196 = smul.addr %s1195, 8
          %s1197 = scalar_lea.hbm %s2, %s1196
          %s1198 = sshll.u32 %s1187, 4
          %s1199 = int_to_ptr.vmem [resolvable:$true] %s1198
          %s1200 = sshll.u32 %s1197, 4
          %s1201 = int_to_ptr.hbm [resolvable:$true] %s1200
          %1206 = dma.vmem_to_hbm [thread:$0]  %s1199, 1024, %s1201, %s1184, 256, 256, 16
        $region40: #{tpu_custom_call.1} parent=27 // pred_fallthru
          _
      $region28: #{tpu_custom_call.1} parent=5 // pred_fallthru
        _
      %p1207 = scmp.le.s32.totalorder 2, %s14
      // Predicated region
      $region41: #{tpu_custom_call.1} parent=5 // pred_check
        %p1208 = pneg %p1207
      $region42: #{tpu_custom_call.1} parent=5 // pred_check_branch
        %1210 = sbr.rel (%p1208) target = $region44
      $region43: #{tpu_custom_call.1} parent=5 // pred_region
        %s1211 = ssub.s32 %s14, 2
        // Predicated region
        $region45: #{tpu_custom_call.1} parent=43 // pred_check
          %p1212 = pneg %p104
        $region46: #{tpu_custom_call.1} parent=43 // pred_check_branch
          %1214 = sbr.rel (%p1212) target = $region48
        $region47: #{tpu_custom_call.1} parent=43 // pred_region
          %s1215 = sand.u32 %s89, 1
          %s1216 = scalar_lea.sflag [#allocation5], %s1215
          %s1217 = sand.u32 %s89, 1
          %s1218 = smul.addr %s1217, 64
          %s1219 = scalar_lea.vmem [#allocation6], %s1218
          %1221 = dma.done %s1216, 1024
        $region48: #{tpu_custom_call.1} parent=43 // pred_fallthru
          _
      $region44: #{tpu_custom_call.1} parent=5 // pred_fallthru
        _
    $region6: #{tpu_custom_call.1} parent=1 // loop_footer
      %s18 = sadd.s32 1, %s14
    $region7: #{tpu_custom_call.1} parent=1 // loop_footer_branch
      %13 = sbr.rel target = $region3
    $region8: #{tpu_custom_call.1} parent=1 // loop_exit
      _
    %1222 = vsyncpa [#allocation4], 1
    %s1223 = scalar_lea.sflag [#allocation4], 1
    %1224 = vsyncpa %s1223, 1
    %1225 = vsyncpa [#allocation5], 1
    %s1226 = scalar_lea.sflag [#allocation5], 1
    %1227 = vsyncpa %s1226, 1

</llo_original>
